<compile_context>
chip_gen: v5e
topology: v5e:2x2
jax: 0.10.0
libtpu: 0.0.40
codegen_flags: <defaults>
</compile_context>

<pallas_src>
import jax
import jax.numpy as jnp
from jax.experimental import pallas as pl
from jax.experimental.pallas import tpu as pltpu  # noqa: F401  (TPU backend)


def linear_layer_kernel(w_ref, x_ref, hidden_ref):
    # One MXU matmul (K = 2N) with f32 accumulation, then EUP tanh epilogue.
    acc = jnp.dot(w_ref[...], x_ref[...], preferred_element_type=jnp.float32)
    hidden_ref[...] = jnp.tanh(acc).astype(hidden_ref.dtype)


def linear_layer_forward(H, C, h, c):
    """Returns (hidden, comm) with the exact semantics of LinearLayer.forward."""
    N, D = h.shape
    assert H.shape == (N, N) and C.shape == (N, N) and c.shape == (N, D)

    # Fuse the two matmuls:  [H | C] @ [h ; c]  ==  H @ h + C @ c
    # (W is a parameter concat — in a real deployment precompute it once.)
    W = jnp.concatenate([H, C], axis=1)          # (N, 2N)
    x = jnp.concatenate([h, c], axis=0)          # (2N, D)

    hidden = pl.pallas_call(
        linear_layer_kernel,
        out_shape=jax.ShapeDtypeStruct((N, D), jnp.float32),
        # No grid: single invocation, whole operands resident in VMEM.
    )(W, x)

    # comm[i] = mean over (N-1) copies of hidden[i] == hidden[i]; alias, no copy.
    comm = hidden
    return hidden, comm


if __name__ == "__main__":
    num_agents = 8     # N
    hidden_dim = 32    # D (columns of h / c)

    key = jax.random.PRNGKey(0)
    kH, kC, kh, kc = jax.random.split(key, 4)

    # Deterministic parameter init, matching nn.Parameter(torch.randn((N, N)))
    H = jax.random.normal(kH, (num_agents, num_agents), dtype=jnp.float32)
    C = jax.random.normal(kC, (num_agents, num_agents), dtype=jnp.float32)

    # Example inputs
    h = jax.random.normal(kh, (num_agents, hidden_dim), dtype=jnp.float32)
    c = jax.random.normal(kc, (num_agents, hidden_dim), dtype=jnp.float32)

    hidden, comm = linear_layer_forward(H, C, h, c)
    jax.block_until_ready((hidden, comm))

    # Reference check in plain JAX
    ref_hidden = jnp.tanh(H @ h + C @ c)
    ref_comm = ref_hidden  # literal semantics of the list-comprehension (see header)
    assert jnp.allclose(hidden, ref_hidden, atol=1e-5, rtol=1e-5)
    assert jnp.allclose(comm, ref_comm, atol=1e-5, rtol=1e-5)

    print("KERNEL_OK")
</pallas_src>

<mosaic_0001>
module attributes {stable_mosaic.version = 11 : i64} {
  func.func @linear_layer_kernel(%arg0: memref<8x16xf32, #tpu.memory_space<vmem>>, %arg1: memref<16x32xf32, #tpu.memory_space<vmem>>, %arg2: memref<8x32xf32, #tpu.memory_space<vmem>>) attributes {dimension_semantics = [], scalar_prefetch = 0 : i64, scratch_operands = 0 : i64, tpu.core_type = #tpu.core_type<tc>} {
    %c0 = arith.constant 0 : index
    %c0_0 = arith.constant 0 : index
    %0 = vector.load %arg0[%c0, %c0_0] : memref<8x16xf32, #tpu.memory_space<vmem>>, vector<8x16xf32>
    %c0_1 = arith.constant 0 : index
    %c0_2 = arith.constant 0 : index
    %1 = vector.load %arg1[%c0_1, %c0_2] : memref<16x32xf32, #tpu.memory_space<vmem>>, vector<16x32xf32>
    %cst = arith.constant dense<0.000000e+00> : vector<8x32xf32>
    %2 = tpu.matmul %0, %1, %cst {dimension_numbers = #tpu.dot_dimension_numbers<[1], [0], [0], [1], [0, 0, 1, 1], [], []>} : vector<8x16xf32>, vector<16x32xf32>, vector<8x32xf32> -> vector<8x32xf32>
    %3 = math.tanh %2 : vector<8x32xf32>
    %c0_3 = arith.constant 0 : index
    %c0_4 = arith.constant 0 : index
    %4 = vector.load %arg2[%c0_3, %c0_4] : memref<8x32xf32, #tpu.memory_space<vmem>>, vector<8x32xf32>
    tpu.vector_store %arg2[%c0_3, %c0_4], %3 {strides = array<i32>} : memref<8x32xf32, #tpu.memory_space<vmem>>, vector<8x32xf32>,
    return
  }
}

</mosaic_0001>

<llo_original>
// kernel: tpu_custom_call.1
$region0: #{tpu_custom_call.1}
  #allocation0 [shape = 'u32[]', space=smem, size = 0x4, offset = 0x4, fixed_abs, tag = 'smem constant byte address 0x4 - core index']
  #allocation1 [shape = 'u32[72,128]{1,0:T(1,128)}', space=vmem, size = 0x9000, scoped, tag = 'internal scratch']
  %s0 = inlined_call_operand.hbm [shape: f32[8,16], index: 0, kind: input, shape index: {}]
  %s1 = inlined_call_operand.hbm [shape: f32[16,32], index: 1, kind: input, shape index: {}]
  %s2 = inlined_call_operand.hbm [shape: f32[8,32], index: 2, kind: output, shape index: {}]
  %s3 = sld [smem:[#allocation0]]
  $region26: #{tpu_custom_call.1} parent=0
    _
  %s5 = ssub.s32 1, %s3
  %s6 = scalar_select 0, %s5, %s3
  $region1: #{tpu_custom_call.1} parent=0
    #allocation2 [shape = 'u8[4096]{0}', space=vmem, size = 0x1000, scoped, tag = 'input window, operand 0, single buffered']
    #allocation3 [shape = 's32[1]{0}', space=sflag, size = 0x4, scoped, tag = 'scoped memory for tpu_custom_call.1']
    #allocation4 [shape = 's32[1]{0}', space=sflag, size = 0x4, scoped, tag = 'scoped memory for tpu_custom_call.1']
    #allocation5 [shape = 'u8[8192]{0}', space=vmem, size = 0x2000, scoped, tag = 'input window, operand 1, single buffered']
    #allocation6 [shape = 's32[1]{0}', space=sflag, size = 0x4, scoped, tag = 'scoped memory for tpu_custom_call.1']
    #allocation7 [shape = 'u8[4096]{0}', space=vmem, size = 0x1000, scoped, tag = 'output window, operand 0, single buffered']
    %7 = vsyncpa [#allocation3], 0
    %8 = vsyncpa [#allocation6], 0
    %9 = vsyncpa [#allocation4], 0
    // Predicated region
    $region2: #{tpu_custom_call.1} parent=1 // pred_check
      _
    $region3: #{tpu_custom_call.1} parent=1 // pred_check_branch
      %11 = sbr.rel (0) target = $region5
    $region4: #{tpu_custom_call.1} parent=1 // pred_region
      %13 = vsyncadd [#allocation3], 0
      %s15 = sshll.u32 %s0, 4
      %s16 = int_to_ptr.hbm [resolvable:$true] %s15
      %s17 = sshll.u32 [#allocation2], 4
      %s18 = int_to_ptr.vmem [resolvable:$true] %s17
      %20 = dma.hbm_to_vmem [thread:$0]  %s16, 128, %s18, [#allocation3]
    $region5: #{tpu_custom_call.1} parent=1 // pred_fallthru
      _
    // Predicated region
    $region6: #{tpu_custom_call.1} parent=1 // pred_check
      _
    $region7: #{tpu_custom_call.1} parent=1 // pred_check_branch
      %22 = sbr.rel (0) target = $region9
    $region8: #{tpu_custom_call.1} parent=1 // pred_region
      %24 = vsyncadd [#allocation6], 0
      %s25 = sshll.u32 %s1, 4
      %s26 = int_to_ptr.hbm [resolvable:$true] %s25
      %s27 = sshll.u32 [#allocation5], 4
      %s28 = int_to_ptr.vmem [resolvable:$true] %s27
      %33 = dma.hbm_to_vmem [thread:$0]  %s26, 256, %s28, [#allocation6], 128, 128, 8
    $region9: #{tpu_custom_call.1} parent=1 // pred_fallthru
      _
    // Predicated region
    $region10: #{tpu_custom_call.1} parent=1 // pred_check
      _
    $region11: #{tpu_custom_call.1} parent=1 // pred_check_branch
      %35 = sbr.rel (0) target = $region13
    $region12: #{tpu_custom_call.1} parent=1 // pred_region
      %37 = dma.done [#allocation3], 128
    $region13: #{tpu_custom_call.1} parent=1 // pred_fallthru
      _
    // Predicated region
    $region14: #{tpu_custom_call.1} parent=1 // pred_check
      _
    $region15: #{tpu_custom_call.1} parent=1 // pred_check_branch
      %39 = sbr.rel (0) target = $region17
    $region16: #{tpu_custom_call.1} parent=1 // pred_region
      %41 = dma.done [#allocation6], 256
    $region17: #{tpu_custom_call.1} parent=1 // pred_fallthru
      _
    %v42 = vld [vmem:[#allocation2] sm:$0xff]
    %v43 = vld [vmem:[#allocation5] sm:$0xff]
    %v44 = vld [vmem:[#allocation5 + $0x8] sm:$0xff]
    %vm45 = vcmask 130048
    %v47 = vsel %vm45, %v42, 0
    %49 = vmatpush.msra.mxu0 0.0
    %50 = vmatpush.msra.mxu0 0.0
    %51 = vmatpush.msra.mxu0 0.0
    %52 = vmatpush.msra.mxu0 0.0
    %53 = vmatpush.msra.mxu0 0.0
    %54 = vmatpush.msra.mxu0 0.0
    %55 = vmatpush.msra.mxu0 0.0
    %56 = vmatpush.msra.mxu0 0.0
    %57 = vmatpush.msra.mxu0 0.0
    %58 = vmatpush.msra.mxu0 0.0
    %59 = vmatpush.msra.mxu0 0.0
    %60 = vmatpush.msra.mxu0 0.0
    %61 = vmatpush.msra.mxu0 0.0
    %62 = vmatpush.msra.mxu0 0.0
    %63 = vmatpush.msra.mxu0 %v44
    %64 = vmatpush.msra.mxu0 %v43
    %65 = vmatmul.f32.gmra.mxu0 %v47
    %v66 = vpop.f32.mrf.mxu0
    %v67 = vadd.f32 0.0, %v66
    %68 = vdwg.mxu0
    %v69 = vtanh.pop %v67
    %vm70 = vcmask 261120
    %71 = vst.msk [vmem:[#allocation7] sm:$0xff] %vm70, %v69
    // Predicated region
    $region18: #{tpu_custom_call.1} parent=1 // pred_check
      _
    $region19: #{tpu_custom_call.1} parent=1 // pred_check_branch
      %73 = sbr.rel (0) target = $region21
    $region20: #{tpu_custom_call.1} parent=1 // pred_region
      %75 = vsyncadd [#allocation4], 0
      %s77 = sshll.u32 [#allocation7], 4
      %s78 = int_to_ptr.vmem [resolvable:$true] %s77
      %s79 = sshll.u32 %s2, 4
      %s80 = int_to_ptr.hbm [resolvable:$true] %s79
      %82 = dma.vmem_to_hbm [thread:$0]  %s78, 128, %s80, [#allocation4]
    $region21: #{tpu_custom_call.1} parent=1 // pred_fallthru
      _
    // Predicated region
    $region22: #{tpu_custom_call.1} parent=1 // pred_check
      _
    $region23: #{tpu_custom_call.1} parent=1 // pred_check_branch
      %84 = sbr.rel (0) target = $region25
    $region24: #{tpu_custom_call.1} parent=1 // pred_region
      %86 = dma.done [#allocation4], 128
    $region25: #{tpu_custom_call.1} parent=1 // pred_fallthru
      _
    %87 = vsyncpa [#allocation3], 1
    %88 = vsyncpa [#allocation6], 1
    %89 = vsyncpa [#allocation4], 1

</llo_original>
